<compile_context>
chip_gen: v5e
topology: v5e:2x2
jax: 0.10.0
libtpu: 0.0.40
codegen_flags: <defaults>
</compile_context>

<pallas_src>
import math

import jax
import jax.numpy as jnp
from jax.experimental import pallas as pl
from jax.experimental.pallas import tpu as pltpu


def _round_up(x, m):
    return (x + m - 1) // m * m


def _pick_tile(n_pad, cap, min_blocks=1):
    """Largest multiple-of-128 tile <= cap that divides n_pad with >= min_blocks blocks."""
    for cand in (2048, 1024, 512, 256, 128):
        if cand <= cap and n_pad % cand == 0 and n_pad // cand >= min_blocks:
            return cand
    return 128


def _vmem_cap_bytes():
    """Generation-aware VMEM budget: ~3/4 of physical (48 MiB v7x, 96 MiB v5e/v6e)."""
    try:
        cap = int(pltpu.get_tpu_info().vmem_capacity_bytes)
        if cap > 0:
            return max(cap * 3 // 4, 32 << 20)
    except Exception:
        pass
    return 48 << 20  # safe on every generation (v7x has 64 MiB per TensorCore)


def _buffered_spec(shape, index_map, buffers):
    """BlockSpec with requested pipeline depth; falls back to default if unsupported."""
    try:
        return pl.BlockSpec(shape, index_map, pipeline_mode=pl.Buffered(buffers))
    except (TypeError, AttributeError):
        return pl.BlockSpec(shape, index_map)


# ---------------------------------------------------------------------------
# Kernel 1: XW = d_j * (X @ W)   (row-tiled, d_j folded in, bf16 output)
# ---------------------------------------------------------------------------
def _xw_kernel(x_ref, w_ref, d_ref, o_ref):
    xw = jnp.dot(x_ref[...], w_ref[...], preferred_element_type=jnp.float32)
    o_ref[...] = (d_ref[...] * xw).astype(o_ref.dtype)


def _compute_xw_scaled(x_pad, w_pad, d_pad, tile_m):
    n_pad, fin = x_pad.shape
    fout_pad = w_pad.shape[1]
    return pl.pallas_call(
        _xw_kernel,
        out_shape=jax.ShapeDtypeStruct((n_pad, fout_pad), jnp.bfloat16),
        grid_spec=pltpu.PrefetchScalarGridSpec(
            num_scalar_prefetch=0,
            grid=(n_pad // tile_m,),
            in_specs=[
                pl.BlockSpec((tile_m, fin), lambda i: (i, 0)),
                pl.BlockSpec((fin, fout_pad), lambda i: (0, 0)),
                pl.BlockSpec((tile_m, 1), lambda i: (i, 0)),
            ],
            out_specs=pl.BlockSpec((tile_m, fout_pad), lambda i: (i, 0)),
        ),
        compiler_params=pltpu.CompilerParams(dimension_semantics=("parallel",)),
    )(x_pad, w_pad, d_pad)


# ---------------------------------------------------------------------------
# Kernel 2: out = d_i * (A @ XW)   (int8 A stream, f32 accumulation in o_ref)
# ---------------------------------------------------------------------------
def _agg_kernel_resident(a_ref, xw_ref, d_ref, o_ref):
    # xw_ref holds the FULL (n_pad, fout_pad) bf16 XW, resident in VMEM.
    k = pl.program_id(1)
    tk = a_ref.shape[1]

    @pl.when(k == 0)
    def _():
        o_ref[...] = jnp.zeros_like(o_ref)

    off = pl.multiple_of(k * tk, tk)
    xw_blk = xw_ref[pl.ds(off, tk), :]
    a_blk = a_ref[...].astype(jnp.float32).astype(xw_blk.dtype)  # 0/1 -> exact bf16
    o_ref[...] += jnp.dot(a_blk, xw_blk, preferred_element_type=jnp.float32)

    @pl.when(k == pl.num_programs(1) - 1)
    def _():
        o_ref[...] = o_ref[...] * d_ref[...]


def _agg_kernel_streamed(a_ref, xw_ref, d_ref, o_ref):
    # xw_ref is the (tile_k, fout_pad) slice, re-streamed per row block (huge-graph path).
    k = pl.program_id(1)

    @pl.when(k == 0)
    def _():
        o_ref[...] = jnp.zeros_like(o_ref)

    a_blk = a_ref[...].astype(jnp.float32).astype(xw_ref.dtype)
    o_ref[...] += jnp.dot(a_blk, xw_ref[...], preferred_element_type=jnp.float32)

    @pl.when(k == pl.num_programs(1) - 1)
    def _():
        o_ref[...] = o_ref[...] * d_ref[...]


def _aggregate(adj_i8, xw_bf16, d_pad, tile_m, tile_k, resident, vmem_cap):
    n_pad = adj_i8.shape[0]
    fout_pad = xw_bf16.shape[1]
    grid = (n_pad // tile_m, n_pad // tile_k)

    if resident:
        kernel = _agg_kernel_resident
        xw_spec = pl.BlockSpec((n_pad, fout_pad), lambda i, k: (0, 0))
        xw_vmem = 2 * n_pad * fout_pad * 2          # conservative: default 2 buffers
        xw_hbm = n_pad * fout_pad * 2               # DMA'd once
    else:
        kernel = _agg_kernel_streamed
        xw_spec = pl.BlockSpec((tile_k, fout_pad), lambda i, k: (k, 0))
        xw_vmem = 2 * tile_k * fout_pad * 2
        xw_hbm = grid[0] * n_pad * fout_pad * 2     # re-streamed per row block

    a_spec = _buffered_spec((tile_m, tile_k), lambda i, k: (i, k), buffers=3)
    d_spec = pl.BlockSpec((tile_m, 1), lambda i, k: (i, 0))
    out_spec = pl.BlockSpec((tile_m, fout_pad), lambda i, k: (i, 0))

    needed = (3 * tile_m * tile_k                   # int8 A, 3-deep
              + xw_vmem
              + 2 * tile_m * fout_pad * 4           # f32 output blocks
              + 2 * tile_m * 4)                     # d blocks
    vmem_limit = int(min(vmem_cap, max(needed + (8 << 20), 32 << 20)))

    flops = 2 * n_pad * n_pad * fout_pad
    bytes_accessed = n_pad * n_pad + xw_hbm + n_pad * fout_pad * 4 + n_pad * 4

    return pl.pallas_call(
        kernel,
        out_shape=jax.ShapeDtypeStruct((n_pad, fout_pad), jnp.float32),
        grid_spec=pltpu.PrefetchScalarGridSpec(
            num_scalar_prefetch=0,
            grid=grid,
            in_specs=[a_spec, xw_spec, d_spec],
            out_specs=out_spec,
        ),
        compiler_params=pltpu.CompilerParams(
            dimension_semantics=("parallel", "arbitrary"),
            vmem_limit_bytes=vmem_limit,
        ),
        cost_estimate=pl.CostEstimate(
            flops=flops, transcendentals=0, bytes_accessed=bytes_accessed
        ),
    )(adj_i8, xw_bf16, d_pad)


# ---------------------------------------------------------------------------
# Wrapper
# ---------------------------------------------------------------------------
def gcn_conv_forward(adj, degrees, x, w, *, tile_m_cap=512, tile_k_cap=2048,
                     xw_resident=None):
    """GNNAdvisor GCN layer forward.

    adj:     [N, N] 0/1 adjacency (bool/int/float), streamed as int8.
    degrees: [N]    inputInfo.degrees == 1/sqrt(deg_i)   (f32 scaling, exact).
    x:       [N, Fin] node features.
    w:       [Fin, Fout] weights.
    Returns out[N, Fout] = d_i * sum_j A_ij * d_j * (X @ W)_j.
    """
    n_nodes, in_dim = x.shape
    out_dim = w.shape[1]

    fout_pad = _round_up(out_dim, 128)              # lane-dense output stores
    n_pad = _round_up(n_nodes, 256)
    tile_m = _pick_tile(n_pad, min(tile_m_cap, 1024), min_blocks=2)   # >=2 row blocks (v7x)
    tile_k = _pick_tile(n_pad, tile_k_cap, min_blocks=1)

    vmem_cap = _vmem_cap_bytes()
    if xw_resident is None:
        xw_resident = (n_pad * fout_pad * 2) <= (vmem_cap // 2)

    # Pad directly in streaming dtypes; padded rows get d=0 so they contribute nothing.
    x_pad = jnp.zeros((n_pad, in_dim), jnp.float32).at[:n_nodes].set(
        x.astype(jnp.float32))
    w_pad = jnp.zeros((in_dim, fout_pad), jnp.float32).at[:, :out_dim].set(
        w.astype(jnp.float32))
    d_pad = jnp.zeros((n_pad, 1), jnp.float32).at[:n_nodes, 0].set(
        degrees.astype(jnp.float32))
    adj_pad = jnp.zeros((n_pad, n_pad), jnp.int8).at[:n_nodes, :n_nodes].set(
        adj.astype(jnp.int8))

    xw = _compute_xw_scaled(x_pad, w_pad, d_pad, tile_m)       # bf16, rows pre-scaled by d_j
    out_pad = _aggregate(adj_pad, xw, d_pad, tile_m, tile_k, xw_resident, vmem_cap)
    return out_pad[:n_nodes, :out_dim].astype(x.dtype)


# ---------------------------------------------------------------------------
# inputInfo-equivalent graph construction (host-side glue for the demo)
# ---------------------------------------------------------------------------
def build_graph(key, n_nodes, avg_deg=4):
    """Deterministic synthetic undirected graph with self-loops (0/1 adjacency, d=1/sqrt(deg))."""
    p = avg_deg / n_nodes
    rnd = jax.random.uniform(key, (n_nodes, n_nodes))
    adj = (rnd < p).astype(jnp.int8)
    adj = jnp.maximum(adj, adj.T)                                   # symmetric
    adj = jnp.maximum(adj, jnp.eye(n_nodes, dtype=jnp.int8))        # self-loops
    deg = adj.astype(jnp.int32).sum(axis=1)
    degrees = 1.0 / jnp.sqrt(deg.astype(jnp.float32))               # inputInfo.degrees
    return adj, degrees


if __name__ == "__main__":
    n_nodes, input_dim, output_dim = 64, 32, 16

    key = jax.random.PRNGKey(0)
    k_graph, k_x, k_w = jax.random.split(key, 3)

    adj, degrees = build_graph(k_graph, n_nodes)
    x = jax.random.normal(k_x, (n_nodes, input_dim), dtype=jnp.float32)

    # GCNConv.reset_parameters: W ~ U(-stdv, stdv), stdv = 1/sqrt(output_dim)
    stdv = 1.0 / math.sqrt(output_dim)
    w = jax.random.uniform(k_w, (input_dim, output_dim), dtype=jnp.float32,
                           minval=-stdv, maxval=stdv)

    # Small tile caps so the tiny demo graph exercises 2 row blocks AND 2 k blocks
    # (production defaults are 512 / 2048).  Run both the VMEM-resident-XW path and
    # the k-streamed fallback.
    out_resident = gcn_conv_forward(adj, degrees, x, w,
                                    tile_m_cap=128, tile_k_cap=128, xw_resident=True)
    out_streamed = gcn_conv_forward(adj, degrees, x, w,
                                    tile_m_cap=128, tile_k_cap=128, xw_resident=False)
    out_resident, out_streamed = jax.block_until_ready((out_resident, out_streamed))

    # References: quantized (bf16 d_j*XW rows, exact 0/1 A, f32 accumulation + f32 d_i)
    # and full-f32 (sanity).
    a_f32 = adj.astype(jnp.float32)
    d = degrees.astype(jnp.float32)
    xw_scaled = d[:, None] * (x @ w)
    ref_q = d[:, None] * (a_f32 @ xw_scaled.astype(jnp.bfloat16).astype(jnp.float32))
    ref_f32 = d[:, None] * (a_f32 @ xw_scaled)

    for out in (out_resident, out_streamed):
        assert out.shape == (n_nodes, output_dim)
        assert jnp.allclose(out, ref_q, atol=2e-2, rtol=2e-2)
        assert jnp.allclose(out, ref_f32, atol=5e-2, rtol=5e-2)

    print("KERNEL_OK")
</pallas_src>

<mosaic_0001>
module attributes {stable_mosaic.version = 11 : i64} {
  func.func @_xw_kernel(%arg0: i32, %arg1: memref<128x32xf32, #tpu.memory_space<vmem>>, %arg2: memref<32x128xf32, #tpu.memory_space<vmem>>, %arg3: memref<128x1xf32, #tpu.memory_space<vmem>>, %arg4: memref<128x128xbf16, #tpu.memory_space<vmem>>) attributes {dimension_semantics = [#tpu.dimension_semantics<parallel>], iteration_bounds = array<i64: 2>, scalar_prefetch = 0 : i64, scratch_operands = 0 : i64, tpu.core_type = #tpu.core_type<tc>, window_params = [{transform_indices = @transform_0, window_bounds = array<i64: 128, 32>}, {pipeline_mode = #tpu.pipeline_mode<synchronous>, transform_indices = @transform_1, window_bounds = array<i64: 32, 128>}, {transform_indices = @transform_2, window_bounds = array<i64: 128, 1>}, {transform_indices = @transform_3, window_bounds = array<i64: 128, 128>}]} {
    %c0 = arith.constant 0 : index
    %c0_0 = arith.constant 0 : index
    %0 = vector.load %arg1[%c0, %c0_0] : memref<128x32xf32, #tpu.memory_space<vmem>>, vector<128x32xf32>
    %c0_1 = arith.constant 0 : index
    %c0_2 = arith.constant 0 : index
    %1 = vector.load %arg2[%c0_1, %c0_2] : memref<32x128xf32, #tpu.memory_space<vmem>>, vector<32x128xf32>
    %cst = arith.constant dense<0.000000e+00> : vector<128x128xf32>
    %2 = tpu.matmul %0, %1, %cst {dimension_numbers = #tpu.dot_dimension_numbers<[1], [0], [0], [1], [0, 0, 1, 1], [], []>} : vector<128x32xf32>, vector<32x128xf32>, vector<128x128xf32> -> vector<128x128xf32>
    %c0_3 = arith.constant 0 : index
    %c0_4 = arith.constant 0 : index
    %3 = vector.load %arg3[%c0_3, %c0_4] : memref<128x1xf32, #tpu.memory_space<vmem>>, vector<128x1xf32>
    %4 = vector.broadcast %3 : vector<128x1xf32> to vector<128x128xf32>
    %5 = arith.mulf %4, %2 : vector<128x128xf32>
    %6 = arith.truncf %5 : vector<128x128xf32> to vector<128x128xbf16>
    %c0_5 = arith.constant 0 : index
    %c0_6 = arith.constant 0 : index
    %7 = vector.load %arg4[%c0_5, %c0_6] : memref<128x128xbf16, #tpu.memory_space<vmem>>, vector<128x128xbf16>
    tpu.vector_store %arg4[%c0_5, %c0_6], %6 {strides = array<i32>} : memref<128x128xbf16, #tpu.memory_space<vmem>>, vector<128x128xbf16>,
    return
  }
  func.func @transform_0(%arg0: i32) -> (i32, i32) {
    %c0_i32 = arith.constant 0 : i32
    %c0_i32_0 = arith.constant 0 : i32
    return %arg0, %c0_i32 : i32, i32
  }
  func.func @transform_1(%arg0: i32) -> (i32, i32) {
    %c0_i32 = arith.constant 0 : i32
    %c0_i32_0 = arith.constant 0 : i32
    %c0_i32_1 = arith.constant 0 : i32
    return %c0_i32, %c0_i32_0 : i32, i32
  }
  func.func @transform_2(%arg0: i32) -> (i32, i32) {
    %c0_i32 = arith.constant 0 : i32
    %c0_i32_0 = arith.constant 0 : i32
    return %arg0, %c0_i32 : i32, i32
  }
  func.func @transform_3(%arg0: i32) -> (i32, i32) {
    %c0_i32 = arith.constant 0 : i32
    %c0_i32_0 = arith.constant 0 : i32
    return %arg0, %c0_i32 : i32, i32
  }
}

</mosaic_0001>

<llo_original>
// kernel: tpu_custom_call.1
$region0: #{tpu_custom_call.1}
  #allocation0 [shape = 'u32[]', space=smem, size = 0x4, offset = 0x4, fixed_abs, tag = 'smem constant byte address 0x4 - core index']
  #allocation1 [shape = 'u32[72,128]{1,0:T(1,128)}', space=vmem, size = 0x9000, scoped, tag = 'internal scratch']
  %s0 = inlined_call_operand.vmem [shape: f32[256,32], index: 0, kind: input, shape index: {}]
  %s1 = inlined_call_operand.vmem [shape: f32[32,128], index: 1, kind: input, shape index: {}]
  %s2 = inlined_call_operand.vmem [shape: f32[256,1], index: 2, kind: input, shape index: {}]
  %s3 = inlined_call_operand.hbm [shape: bf16[256,128], index: 3, kind: output, shape index: {}]
  %s4 = sld [smem:[#allocation0]]
  $region45: #{tpu_custom_call.1} parent=0
    _
  %s6 = ssub.s32 1, %s4
  %s7 = scalar_select 0, %s6, %s4
  $region1: #{tpu_custom_call.1} parent=0
    #allocation2 [shape = 'u8[65536]{0}', space=vmem, size = 0x10000, scoped, tag = 'output window, operand 0']
    #allocation3 [shape = 's32[2]{0}', space=sflag, size = 0x8, scoped, tag = 'scoped memory for tpu_custom_call.1']
    %8 = vsyncpa [#allocation3], 0
    %s9 = scalar_lea.sflag [#allocation3], 1
    %10 = vsyncpa %s9, 0
    loop: start=0, step=1, limit=4
    $region2: #{tpu_custom_call.1} parent=1 // loop_pre_header
      _
    $region3: #{tpu_custom_call.1} parent=1 // loop_header
      %s12 = sphi 0, %s16
      %p13 = scmp.ge.s32.totalorder %s12, 4
      %s22 = sphi 0, %s24
      %s25 = sphi 0, %s22
      %s26 = sphi 0, %s25
      %s42 = sphi 0, %s26
      %s46 = sphi 0, %s46
      %s48 = sphi 0, %s46
      %s49 = sphi 0, %s48
      %s63 = sphi 0, %s49
      %s69 = sphi 0, %s71
      %s72 = sphi 0, %s69
      %s73 = sphi 0, %s72
      %s89 = sphi 0, %s73
      %s95 = sphi 0, %s97
      %s98 = sphi 0, %s95
      %s99 = sphi 0, %s98
      %s115 = sphi 0, %s99
    $region4: #{tpu_custom_call.1} parent=1 // loop_header_branch
      %15 = sbr.rel (%p13) target = $region8
    $region5: #{tpu_custom_call.1} parent=1 // loop_body
      %s17 = ssub.s32 %s12, 1
      %s18 = ssub.s32 %s12, 2
      %s19 = sadd.s32 %s12, 1
      %s20 = ssub.s32 %s12, %s19
      %p21 = scmp.eq.s32.totalorder %s20, 0
      %s23 = sadd.s32 %s22, 1
      %s24 = scalar_select %p21, %s22, %s23
      %p27 = pneg %p21
      %p28 = scmp.eq.s32.totalorder %s12, 1
      %p29 = por %p27, %p28
      %p30 = scmp.ne.s32.totalorder %s22, %s25
      %p31 = scmp.eq.s32.totalorder %s12, 0
      %p32 = por %p30, %p31
      %p33 = scmp.ne.s32.totalorder %s22, %s25
      %p34 = scmp.eq.s32.totalorder %s17, 1
      %p35 = por %p33, %p34
      %p36 = scmp.ne.s32.totalorder %s25, %s26
      %p37 = scmp.eq.s32.totalorder %s17, 0
      %p38 = por %p36, %p37
      %p39 = scmp.ne.s32.totalorder %s25, %s26
      %p40 = scmp.eq.s32.totalorder %s18, 1
      %p41 = por %p39, %p40
      %p43 = scmp.ne.s32.totalorder %s26, %s42
      %p44 = scmp.eq.s32.totalorder %s18, 0
      %p45 = por %p43, %p44
      %s47 = sadd.s32 %s46, 1
      %p50 = scmp.eq.s32.totalorder %s12, 1
      %p51 = scmp.ne.s32.totalorder %s46, %s48
      %p52 = scmp.eq.s32.totalorder %s12, 0
      %p53 = por %p51, %p52
      %p54 = scmp.ne.s32.totalorder %s46, %s48
      %p55 = scmp.eq.s32.totalorder %s17, 1
      %p56 = por %p54, %p55
      %p57 = scmp.ne.s32.totalorder %s48, %s49
      %p58 = scmp.eq.s32.totalorder %s17, 0
      %p59 = por %p57, %p58
      %p60 = scmp.ne.s32.totalorder %s48, %s49
      %p61 = scmp.eq.s32.totalorder %s18, 1
      %p62 = por %p60, %p61
      %p64 = scmp.ne.s32.totalorder %s49, %s63
      %p65 = scmp.eq.s32.totalorder %s18, 0
      %p66 = por %p64, %p65
      %s67 = ssub.s32 %s12, %s19
      %p68 = scmp.eq.s32.totalorder %s67, 0
      %s70 = sadd.s32 %s69, 1
      %s71 = scalar_select %p68, %s69, %s70
      %p74 = pneg %p68
      %p75 = scmp.eq.s32.totalorder %s12, 1
      %p76 = por %p74, %p75
      %p77 = scmp.ne.s32.totalorder %s69, %s72
      %p78 = scmp.eq.s32.totalorder %s12, 0
      %p79 = por %p77, %p78
      %p80 = scmp.ne.s32.totalorder %s69, %s72
      %p81 = scmp.eq.s32.totalorder %s17, 1
      %p82 = por %p80, %p81
      %p83 = scmp.ne.s32.totalorder %s72, %s73
      %p84 = scmp.eq.s32.totalorder %s17, 0
      %p85 = por %p83, %p84
      %p86 = scmp.ne.s32.totalorder %s72, %s73
      %p87 = scmp.eq.s32.totalorder %s18, 1
      %p88 = por %p86, %p87
      %p90 = scmp.ne.s32.totalorder %s73, %s89
      %p91 = scmp.eq.s32.totalorder %s18, 0
      %p92 = por %p90, %p91
      %s93 = ssub.s32 %s12, %s19
      %p94 = scmp.eq.s32.totalorder %s93, 0
      %s96 = sadd.s32 %s95, 1
      %s97 = scalar_select %p94, %s95, %s96
      %p100 = pneg %p94
      %p101 = scmp.eq.s32.totalorder %s12, 1
      %p102 = por %p100, %p101
      %p103 = scmp.ne.s32.totalorder %s95, %s98
      %p104 = scmp.eq.s32.totalorder %s12, 0
      %p105 = por %p103, %p104
      %p106 = scmp.ne.s32.totalorder %s95, %s98
      %p107 = scmp.eq.s32.totalorder %s17, 1
      %p108 = por %p106, %p107
      %p109 = scmp.ne.s32.totalorder %s98, %s99
      %p110 = scmp.eq.s32.totalorder %s17, 0
      %p111 = por %p109, %p110
      %p112 = scmp.ne.s32.totalorder %s98, %s99
      %p113 = scmp.eq.s32.totalorder %s18, 1
      %p114 = por %p112, %p113
      %p116 = scmp.ne.s32.totalorder %s99, %s115
      %p117 = scmp.eq.s32.totalorder %s18, 0
      %p118 = por %p116, %p117
      %p119 = scmp.le.s32.totalorder 1, %s12
      %p120 = scmp.lt.s32.totalorder %s12, 3
      %p121 = pnand %p119, %p120
      %p122 = pneg %p121
      // Predicated region
      $region9: #{tpu_custom_call.1} parent=5 // pred_check
        _
      $region10: #{tpu_custom_call.1} parent=5 // pred_check_branch
        %124 = sbr.rel (%p121) target = $region12
      $region11: #{tpu_custom_call.1} parent=5 // pred_region
        %s125 = ssub.s32 %s12, 1
        // Predicated region
        $region13: #{tpu_custom_call.1} parent=11 // pred_check
          %p126 = pneg %p59
        $region14: #{tpu_custom_call.1} parent=11 // pred_check_branch
          %128 = sbr.rel (%p126) target = $region16
        $region15: #{tpu_custom_call.1} parent=11 // pred_region
          _
        $region16: #{tpu_custom_call.1} parent=11 // pred_fallthru
          _
      $region12: #{tpu_custom_call.1} parent=5 // pred_fallthru
        _
      %p129 = scmp.lt.s32.totalorder %s12, 2
      // Predicated region
      $region17: #{tpu_custom_call.1} parent=5 // pred_check
        %p130 = pneg %p129
      $region18: #{tpu_custom_call.1} parent=5 // pred_check_branch
        %132 = sbr.rel (%p130) target = $region20
      $region19: #{tpu_custom_call.1} parent=5 // pred_region
        // Predicated region
        $region21: #{tpu_custom_call.1} parent=19 // pred_check
          %p133 = pneg %p32
        $region22: #{tpu_custom_call.1} parent=19 // pred_check_branch
          %135 = sbr.rel (%p133) target = $region24
        $region23: #{tpu_custom_call.1} parent=19 // pred_region
          %s136 = smul.u32 16, %s12
          %p137 = scmp.lt.s32.totalorder %s136, 31
          %s138 = scalar_select %p137, %s136, 31
          %s139 = smul.addr %s138, 8
          %s140 = scalar_lea.vmem %s0, %s139
          %s141 = smul.u32 16, %s12
        $region24: #{tpu_custom_call.1} parent=19 // pred_fallthru
          _
        // Predicated region
        $region25: #{tpu_custom_call.1} parent=19 // pred_check
          %p142 = pneg %p79
        $region26: #{tpu_custom_call.1} parent=19 // pred_check_branch
          %144 = sbr.rel (%p142) target = $region28
        $region27: #{tpu_custom_call.1} parent=19 // pred_region
          %s145 = smul.u32 16, %s12
          %p146 = scmp.lt.s32.totalorder %s145, 31
          %s147 = scalar_select %p146, %s145, 31
          %s148 = smul.addr %s147, 8
          %s149 = scalar_lea.vmem %s2, %s148
          %s150 = smul.u32 16, %s12
        $region28: #{tpu_custom_call.1} parent=19 // pred_fallthru
          _
      $region20: #{tpu_custom_call.1} parent=5 // pred_fallthru
        _
      %p151 = scmp.le.s32.totalorder 1, %s12
      %p152 = scmp.lt.s32.totalorder %s12, 3
      %p153 = pnand %p151, %p152
      %p154 = pneg %p153
      // Predicated region
      $region29: #{tpu_custom_call.1} parent=5 // pred_check
        _
      $region30: #{tpu_custom_call.1} parent=5 // pred_check_branch
        %156 = sbr.rel (%p153) target = $region32
      $region31: #{tpu_custom_call.1} parent=5 // pred_region
        %s157 = ssub.s32 %s12, 1
        %s158 = smul.u32 16, %s17
        %p159 = scmp.lt.s32.totalorder %s158, 31
        %s160 = scalar_select %p159, %s158, 31
        %s161 = smul.addr %s160, 8
        %s162 = scalar_lea.vmem %s0, %s161
        %p163 = pneg %p38
        %p164 = pneg %p35
        %p165 = pneg %p59
        %p166 = pneg %p56
        %s167 = smul.u32 16, %s17
        %p168 = scmp.lt.s32.totalorder %s167, 31
        %s169 = scalar_select %p168, %s167, 31
        %s170 = smul.addr %s169, 8
        %s171 = scalar_lea.vmem %s2, %s170
        %p172 = pneg %p85
        %p173 = pneg %p82
        %p174 = pneg %p111
        %p175 = pneg %p108
        %s176 = sand.u32 %s98, 1
        %s177 = scalar_lea.sflag [#allocation3], %s176
        %s178 = sand.u32 %s98, 1
        %s179 = smul.addr %s178, 64
        %s180 = scalar_lea.vmem [#allocation2], %s179
        %s181 = smul.u32 16, %s17
        %p182 = scmp.lt.s32.totalorder %s181, 31
        %s183 = scalar_select %p182, %s181, 31
        %s184 = smul.addr %s183, 8
        %s185 = scalar_lea.vmem %s0, %s184
        %s186 = smul.u32 16, %s17
        %s187 = smul.u32 16, %s17
        %p188 = scmp.lt.s32.totalorder %s187, 31
        %s189 = scalar_select %p188, %s187, 31
        %s190 = smul.addr %s189, 8
        %s191 = scalar_lea.vmem %s2, %s190
        %s192 = smul.u32 16, %s17
        %s193 = smul.u32 16, %s17
        %v194 = vld [vmem:[%s185] sm:$0xff]
        %v195 = vld [vmem:[%s185 + $0x8] sm:$0xff]
        %v196 = vld [vmem:[%s185 + $0x10] sm:$0xff]
        %v197 = vld [vmem:[%s185 + $0x18] sm:$0xff]
        %v198 = vld [vmem:[%s185 + $0x20] sm:$0xff]
        %v199 = vld [vmem:[%s185 + $0x28] sm:$0xff]
        %v200 = vld [vmem:[%s185 + $0x30] sm:$0xff]
        %v201 = vld [vmem:[%s185 + $0x38] sm:$0xff]
        %v202 = vld [vmem:[%s185 + $0x40] sm:$0xff]
        %v203 = vld [vmem:[%s185 + $0x48] sm:$0xff]
        %v204 = vld [vmem:[%s185 + $0x50] sm:$0xff]
        %v205 = vld [vmem:[%s185 + $0x58] sm:$0xff]
        %v206 = vld [vmem:[%s185 + $0x60] sm:$0xff]
        %v207 = vld [vmem:[%s185 + $0x68] sm:$0xff]
        %v208 = vld [vmem:[%s185 + $0x70] sm:$0xff]
        %v209 = vld [vmem:[%s185 + $0x78] sm:$0xff]
        %v210 = vld [vmem:[%s1] sm:$0xff]
        %v211 = vld [vmem:[%s1 + $0x8] sm:$0xff]
        %v212 = vld [vmem:[%s1 + $0x10] sm:$0xff]
        %v213 = vld [vmem:[%s1 + $0x18] sm:$0xff]
        %vm214 = vcmask 261120
        %v216 = vsel %vm214, %v194, 0
        %v219 = vsel %vm214, %v195, 0
        %v222 = vsel %vm214, %v196, 0
        %v225 = vsel %vm214, %v197, 0
        %v228 = vsel %vm214, %v198, 0
        %v231 = vsel %vm214, %v199, 0
        %v234 = vsel %vm214, %v200, 0
        %v237 = vsel %vm214, %v201, 0
        %v240 = vsel %vm214, %v202, 0
        %v243 = vsel %vm214, %v203, 0
        %v246 = vsel %vm214, %v204, 0
        %v249 = vsel %vm214, %v205, 0
        %v252 = vsel %vm214, %v206, 0
        %v255 = vsel %vm214, %v207, 0
        %v258 = vsel %vm214, %v208, 0
        %v261 = vsel %vm214, %v209, 0
        %263 = vmatpush.msra.mxu0 0.0
        %264 = vmatpush.msra.mxu0 0.0
        %265 = vmatpush.msra.mxu0 0.0
        %266 = vmatpush.msra.mxu0 0.0
        %267 = vmatpush.msra.mxu0 0.0
        %268 = vmatpush.msra.mxu0 0.0
        %269 = vmatpush.msra.mxu0 0.0
        %270 = vmatpush.msra.mxu0 0.0
        %271 = vmatpush.msra.mxu0 0.0
        %272 = vmatpush.msra.mxu0 0.0
        %273 = vmatpush.msra.mxu0 0.0
        %274 = vmatpush.msra.mxu0 0.0
        %275 = vmatpush.msra.mxu0 %v213
        %276 = vmatpush.msra.mxu0 %v212
        %277 = vmatpush.msra.mxu0 %v211
        %278 = vmatpush.msra.mxu0 %v210
        %279 = vmatmul.f32.gmra.mxu0 %v216
        %v280 = vpop.f32.mrf.mxu0
        %v281 = vadd.f32 0.0, %v280
        %282 = vmatmul.f32.gmra.mxu0 %v219
        %v283 = vpop.f32.mrf.mxu0
        %v284 = vadd.f32 0.0, %v283
        %285 = vmatmul.f32.gmra.mxu0 %v222
        %v286 = vpop.f32.mrf.mxu0
        %v287 = vadd.f32 0.0, %v286
        %288 = vmatmul.f32.gmra.mxu0 %v225
        %v289 = vpop.f32.mrf.mxu0
        %v290 = vadd.f32 0.0, %v289
        %291 = vmatmul.f32.gmra.mxu0 %v228
        %v292 = vpop.f32.mrf.mxu0
        %v293 = vadd.f32 0.0, %v292
        %294 = vmatmul.f32.gmra.mxu0 %v231
        %v295 = vpop.f32.mrf.mxu0
        %v296 = vadd.f32 0.0, %v295
        %297 = vmatmul.f32.gmra.mxu0 %v234
        %v298 = vpop.f32.mrf.mxu0
        %v299 = vadd.f32 0.0, %v298
        %300 = vmatmul.f32.gmra.mxu0 %v237
        %v301 = vpop.f32.mrf.mxu0
        %v302 = vadd.f32 0.0, %v301
        %303 = vmatmul.f32.gmra.mxu0 %v240
        %v304 = vpop.f32.mrf.mxu0
        %v305 = vadd.f32 0.0, %v304
        %306 = vmatmul.f32.gmra.mxu0 %v243
        %v307 = vpop.f32.mrf.mxu0
        %v308 = vadd.f32 0.0, %v307
        %309 = vmatmul.f32.gmra.mxu0 %v246
        %v310 = vpop.f32.mrf.mxu0
        %v311 = vadd.f32 0.0, %v310
        %312 = vmatmul.f32.gmra.mxu0 %v249
        %v313 = vpop.f32.mrf.mxu0
        %v314 = vadd.f32 0.0, %v313
        %315 = vmatmul.f32.gmra.mxu0 %v252
        %v316 = vpop.f32.mrf.mxu0
        %v317 = vadd.f32 0.0, %v316
        %318 = vmatmul.f32.gmra.mxu0 %v255
        %v319 = vpop.f32.mrf.mxu0
        %v320 = vadd.f32 0.0, %v319
        %321 = vmatmul.f32.gmra.mxu0 %v258
        %v322 = vpop.f32.mrf.mxu0
        %v323 = vadd.f32 0.0, %v322
        %324 = vmatmul.f32.gmra.mxu0 %v261
        %v325 = vpop.f32.mrf.mxu0
        %v326 = vadd.f32 0.0, %v325
        %327 = vdwg.mxu0
        %v328 = vld [vmem:[%s191] sm:$0xff]
        %v329 = vld [vmem:[%s191 + $0x8] sm:$0xff]
        %v330 = vld [vmem:[%s191 + $0x10] sm:$0xff]
        %v331 = vld [vmem:[%s191 + $0x18] sm:$0xff]
        %v332 = vld [vmem:[%s191 + $0x20] sm:$0xff]
        %v333 = vld [vmem:[%s191 + $0x28] sm:$0xff]
        %v334 = vld [vmem:[%s191 + $0x30] sm:$0xff]
        %v335 = vld [vmem:[%s191 + $0x38] sm:$0xff]
        %v336 = vld [vmem:[%s191 + $0x40] sm:$0xff]
        %v337 = vld [vmem:[%s191 + $0x48] sm:$0xff]
        %v338 = vld [vmem:[%s191 + $0x50] sm:$0xff]
        %v339 = vld [vmem:[%s191 + $0x58] sm:$0xff]
        %v340 = vld [vmem:[%s191 + $0x60] sm:$0xff]
        %v341 = vld [vmem:[%s191 + $0x68] sm:$0xff]
        %v342 = vld [vmem:[%s191 + $0x70] sm:$0xff]
        %v343 = vld [vmem:[%s191 + $0x78] sm:$0xff]
        %345 = vset.pattern.permute.xlu0 0
        %346 = vperm.xlu0 %345, %v328
        %v347 = vpop.permute.xlu0 %346
        %350 = vset.pattern.permute.xlu0 0
        %351 = vperm.xlu0 %350, %v329
        %v352 = vpop.permute.xlu0 %351
        %355 = vset.pattern.permute.xlu0 0
        %356 = vperm.xlu0 %355, %v330
        %v357 = vpop.permute.xlu0 %356
        %360 = vset.pattern.permute.xlu0 0
        %361 = vperm.xlu0 %360, %v331
        %v362 = vpop.permute.xlu0 %361
        %365 = vset.pattern.permute.xlu0 0
        %366 = vperm.xlu0 %365, %v332
        %v367 = vpop.permute.xlu0 %366
        %370 = vset.pattern.permute.xlu0 0
        %371 = vperm.xlu0 %370, %v333
        %v372 = vpop.permute.xlu0 %371
        %375 = vset.pattern.permute.xlu0 0
        %376 = vperm.xlu0 %375, %v334
        %v377 = vpop.permute.xlu0 %376
        %380 = vset.pattern.permute.xlu0 0
        %381 = vperm.xlu0 %380, %v335
        %v382 = vpop.permute.xlu0 %381
        %385 = vset.pattern.permute.xlu0 0
        %386 = vperm.xlu0 %385, %v336
        %v387 = vpop.permute.xlu0 %386
        %390 = vset.pattern.permute.xlu0 0
        %391 = vperm.xlu0 %390, %v337
        %v392 = vpop.permute.xlu0 %391
        %395 = vset.pattern.permute.xlu0 0
        %396 = vperm.xlu0 %395, %v338
        %v397 = vpop.permute.xlu0 %396
        %400 = vset.pattern.permute.xlu0 0
        %401 = vperm.xlu0 %400, %v339
        %v402 = vpop.permute.xlu0 %401
        %405 = vset.pattern.permute.xlu0 0
        %406 = vperm.xlu0 %405, %v340
        %v407 = vpop.permute.xlu0 %406
        %410 = vset.pattern.permute.xlu0 0
        %411 = vperm.xlu0 %410, %v341
        %v412 = vpop.permute.xlu0 %411
        %415 = vset.pattern.permute.xlu0 0
        %416 = vperm.xlu0 %415, %v342
        %v417 = vpop.permute.xlu0 %416
        %420 = vset.pattern.permute.xlu0 0
        %421 = vperm.xlu0 %420, %v343
        %v422 = vpop.permute.xlu0 %421
        %v424 = vmul.f32 %v347, %v281
        %v425 = vmul.f32 %v352, %v284
        %v426 = vmul.f32 %v357, %v287
        %v427 = vmul.f32 %v362, %v290
        %v428 = vmul.f32 %v367, %v293
        %v429 = vmul.f32 %v372, %v296
        %v430 = vmul.f32 %v377, %v299
        %v431 = vmul.f32 %v382, %v302
        %v432 = vmul.f32 %v387, %v305
        %v433 = vmul.f32 %v392, %v308
        %v434 = vmul.f32 %v397, %v311
        %v435 = vmul.f32 %v402, %v314
        %v436 = vmul.f32 %v407, %v317
        %v437 = vmul.f32 %v412, %v320
        %v438 = vmul.f32 %v417, %v323
        %v439 = vmul.f32 %v422, %v326
        %v440 = vpack.c.bf16 %v424, %v424
        %v441 = vpack.c.bf16 %v425, %v425
        %v442 = vpack.c.bf16 %v426, %v426
        %v443 = vpack.c.bf16 %v427, %v427
        %v444 = vpack.c.bf16 %v428, %v428
        %v445 = vpack.c.bf16 %v429, %v429
        %v446 = vpack.c.bf16 %v430, %v430
        %v447 = vpack.c.bf16 %v431, %v431
        %v448 = vpack.c.bf16 %v432, %v432
        %v449 = vpack.c.bf16 %v433, %v433
        %v450 = vpack.c.bf16 %v434, %v434
        %v451 = vpack.c.bf16 %v435, %v435
        %v452 = vpack.c.bf16 %v436, %v436
        %v453 = vpack.c.bf16 %v437, %v437
        %v454 = vpack.c.bf16 %v438, %v438
        %v455 = vpack.c.bf16 %v439, %v439
        %456 = vst [vmem:[%s180] sm:$0xf] %v440
        %457 = vst [vmem:[%s180 + $0x4] sm:$0xf] %v441
        %458 = vst [vmem:[%s180 + $0x8] sm:$0xf] %v442
        %459 = vst [vmem:[%s180 + $0xc] sm:$0xf] %v443
        %460 = vst [vmem:[%s180 + $0x10] sm:$0xf] %v444
        %461 = vst [vmem:[%s180 + $0x14] sm:$0xf] %v445
        %462 = vst [vmem:[%s180 + $0x18] sm:$0xf] %v446
        %463 = vst [vmem:[%s180 + $0x1c] sm:$0xf] %v447
        %464 = vst [vmem:[%s180 + $0x20] sm:$0xf] %v448
        %465 = vst [vmem:[%s180 + $0x24] sm:$0xf] %v449
        %466 = vst [vmem:[%s180 + $0x28] sm:$0xf] %v450
        %467 = vst [vmem:[%s180 + $0x2c] sm:$0xf] %v451
        %468 = vst [vmem:[%s180 + $0x30] sm:$0xf] %v452
        %469 = vst [vmem:[%s180 + $0x34] sm:$0xf] %v453
        %470 = vst [vmem:[%s180 + $0x38] sm:$0xf] %v454
        %471 = vst [vmem:[%s180 + $0x3c] sm:$0xf] %v455
        %s472 = sand.u32 %s98, 1
        %s473 = scalar_lea.sflag [#allocation3], %s472
        %s474 = sand.u32 %s98, 1
        %s475 = smul.addr %s474, 64
        %s476 = scalar_lea.vmem [#allocation2], %s475
        // Predicated region
        $region33: #{tpu_custom_call.1} parent=31 // pred_check
          %p477 = pneg %p108
        $region34: #{tpu_custom_call.1} parent=31 // pred_check_branch
          %479 = sbr.rel (%p477) target = $region36
        $region35: #{tpu_custom_call.1} parent=31 // pred_region
          %s480 = smul.u32 16, %s17
          %482 = vsyncadd %s473, 0
          %s483 = smul.addr %s480, 4
          %s484 = scalar_lea.hbm %s3, %s483
          %s485 = sshll.u32 %s476, 4
          %s486 = int_to_ptr.vmem [resolvable:$true] %s485
          %s487 = sshll.u32 %s484, 4
          %s488 = int_to_ptr.hbm [resolvable:$true] %s487
          %493 = dma.vmem_to_hbm [thread:$0]  %s486, 1024, %s488, %s473, 64, 64, 4
        $region36: #{tpu_custom_call.1} parent=31 // pred_fallthru
          _
      $region32: #{tpu_custom_call.1} parent=5 // pred_fallthru
        _
      %p494 = scmp.le.s32.totalorder 2, %s12
      // Predicated region
      $region37: #{tpu_custom_call.1} parent=5 // pred_check
        %p495 = pneg %p494
      $region38: #{tpu_custom_call.1} parent=5 // pred_check_branch
        %497 = sbr.rel (%p495) target = $region40
      $region39: #{tpu_custom_call.1} parent=5 // pred_region
        %s498 = ssub.s32 %s12, 2
        // Predicated region
        $region41: #{tpu_custom_call.1} parent=39 // pred_check
          %p499 = pneg %p114
        $region42: #{tpu_custom_call.1} parent=39 // pred_check_branch
          %501 = sbr.rel (%p499) target = $region44
        $region43: #{tpu_custom_call.1} parent=39 // pred_region
          %s502 = sand.u32 %s99, 1
          %s503 = scalar_lea.sflag [#allocation3], %s502
          %s504 = sand.u32 %s99, 1
          %s505 = smul.addr %s504, 64
          %s506 = scalar_lea.vmem [#allocation2], %s505
          %508 = dma.done %s503, 1024
        $region44: #{tpu_custom_call.1} parent=39 // pred_fallthru
          _
      $region40: #{tpu_custom_call.1} parent=5 // pred_fallthru
        _
    $region6: #{tpu_custom_call.1} parent=1 // loop_footer
      %s16 = sadd.s32 1, %s12
    $region7: #{tpu_custom_call.1} parent=1 // loop_footer_branch
      %11 = sbr.rel target = $region3
    $region8: #{tpu_custom_call.1} parent=1 // loop_exit
      _
    %509 = vsyncpa [#allocation3], 1
    %s510 = scalar_lea.sflag [#allocation3], 1
    %511 = vsyncpa %s510, 1

</llo_original>
